<compile_context>
chip_gen: v5e
topology: v5e:2x2
jax: 0.10.0
libtpu: 0.0.40
codegen_flags: <defaults>
</compile_context>

<pallas_src>
import functools
import math

import jax
import jax.numpy as jnp
from jax.experimental import pallas as pl
from jax.experimental.pallas import tpu as pltpu

MIB = 1 << 20


def _round_up(x, m):
    return ((x + m - 1) // m) * m


def _pick_batch_tile(B, max_tile=256):
    """Largest multiple-of-8 divisor of B up to max_tile; prefer >=2 batch
    steps (v7x has 2 TensorCores and 'parallel' batch is what shards across
    them). Falls back to tb=B for small / odd B."""
    cands = [t for t in range(8, min(B, max_tile) + 1, 8) if B % t == 0]
    if not cands:
        return B
    tb = max(cands)
    if B // tb < 2:
        two = [t for t in cands if B // t >= 2]
        if two:
            tb = max(two)
    return tb


def _pick_seq_tile(S, tb, D, itemsize, align, budget_bytes):
    """Largest packing-aligned divisor of S whose x tile fits the budget."""
    cands = [ts for ts in range(S, 0, -1)
             if S % ts == 0 and (ts == S or ts % align == 0)]
    for ts in cands:
        if tb * ts * D * itemsize <= budget_bytes:
            return ts
    return cands[-1]


def head_kernel(x_ref, w_ref, b_ref, o_ref, acc_ref, *, inv_seq_len):
    """One (batch-tile, seq-tile) grid step.

    x_ref:   (tb, ts, D)   input activations (f32 / bf16 / ...)
    w_ref:   (D, Cp)       pre-transposed class-projection weight (padded C)
    b_ref:   (1, Cp) f32   bias; padded entries are -inf
    o_ref:   (tb, Cp)      padded softmax output
    acc_ref: (tb, D)  f32  running seq-sum accumulator (VMEM scratch)
    """
    s_idx = pl.program_id(1)

    @pl.when(s_idx == 0)
    def _init():
        acc_ref[...] = jnp.zeros_like(acc_ref)

    # Sequence-sum accumulated directly in f32.
    # TODO(synk): verify via pl.lower_as_mlir that Mosaic does not materialize
    # a full f32 copy of the (tb, ts, D) tile for sub-32-bit inputs; the
    # vmem_limit below conservatively budgets for one.
    acc_ref[...] += jnp.sum(x_ref[...], axis=1, dtype=jnp.float32)

    @pl.when(s_idx == pl.num_programs(1) - 1)
    def _finalize():
        x_sum = acc_ref[...]                                   # (tb, D) f32
        w = w_ref[...].astype(jnp.float32)                     # tiny, once/tile
        logits = jnp.dot(x_sum, w, preferred_element_type=jnp.float32)
        # Fold the 1/S mean scale into the small (tb, Cp) logits, add bias.
        logits = logits * inv_seq_len + b_ref[...]
        # Softmax over the padded class axis; padded classes are -inf -> 0.
        m = jnp.max(logits, axis=-1, keepdims=True)
        e = jnp.exp(logits - m)
        denom = jnp.sum(e, axis=-1, keepdims=True)
        o_ref[...] = (e / denom).astype(o_ref.dtype)


def transformer_basic_head(x, weight, bias, *, seq_tile=None, batch_tile=None):
    """TAPIS TransformerBasicHead forward (cls_embed=False, eval, softmax).

    x: (B, S, D); weight: (C, D) torch nn.Linear layout; bias: (C,).
    Returns (B, C) softmax probabilities in x.dtype.

    This kernel is HBM-bandwidth-bound: casting x to bf16 upstream roughly
    halves streamed bytes; the reduction and finalize matmul stay in f32.
    """
    B, S, D = x.shape
    C, Dw = weight.shape
    assert Dw == D

    # ---- lane-dense class axis: pad C up to a multiple of 128 ----------------
    Cp = _round_up(C, 128)
    # Pre-transpose ONCE to (D, Cp): no per-finalize relayout in the kernel.
    w_pad = jnp.zeros((D, Cp), dtype=weight.dtype).at[:, :C].set(weight.T)
    b_pad = jnp.full((1, Cp), -jnp.inf, dtype=jnp.float32).at[0, :C].set(
        bias.astype(jnp.float32))

    itemsize = jnp.dtype(x.dtype).itemsize
    # Sublane packing: f32 -> 8-row tiles, bf16 -> 16, int8/fp8 -> 32.
    align = 8 * max(1, 4 // itemsize)

    # ---- generation-aware VMEM budgets ---------------------------------------
    try:
        vmem_cap = int(pltpu.get_tpu_info().vmem_capacity_bytes)
    except Exception:
        vmem_cap = 64 * MIB                     # conservative (v7x-sized)
    if vmem_cap >= 96 * MIB:                    # v5e / v6e: 128 MiB physical
        cap_limit = 96 * MIB
        x_budget_gen = 12 * MIB
    else:                                       # v7x: 64 MiB physical
        cap_limit = 36 * MIB
        x_budget_gen = 8 * MIB

    # ---- tiling ---------------------------------------------------------------
    if batch_tile is None:
        batch_tile = _pick_batch_tile(B)        # up to 256 rows; >=2 batch steps
    tb = batch_tile
    assert B % tb == 0, "batch_tile must divide B"
    assert tb == B or tb % 8 == 0, "batch_tile must be a multiple of 8 or B"

    # Residents sized conservatively (double-buffered, in case the Buffered(1)
    # path falls back to default specs).
    resident_bytes = (2 * D * Cp * jnp.dtype(w_pad.dtype).itemsize   # weight
                      + 2 * Cp * 4                                   # bias
                      + 2 * tb * Cp * itemsize                       # out block
                      + tb * D * 4)                                  # f32 scratch
    headroom = 4 * MIB
    # 2 pipeline buffers for x, plus an allowance for a possible f32 temp of
    # one tile in the sub-32-bit reduction.
    mult = 2 + max(0, 4 // itemsize - 1)
    avail = max(cap_limit - resident_bytes - headroom, 0)
    x_budget = min(x_budget_gen, max(avail // mult, 0))
    x_budget = max(x_budget, tb * align * D * itemsize)   # >= one minimal tile

    if seq_tile is None:
        seq_tile = _pick_seq_tile(S, tb, D, itemsize, align, x_budget)
    ts = seq_tile
    assert S % ts == 0 and (ts == S or ts % 8 == 0), "bad seq_tile"

    grid = (B // tb, S // ts)

    x_tile_bytes = tb * ts * D * itemsize
    needed = mult * x_tile_bytes + resident_bytes
    vmem_limit = int(max(min(needed + headroom, cap_limit), needed, 16 * MIB))

    kernel = functools.partial(head_kernel, inv_seq_len=1.0 / float(S))
    out_shape = jax.ShapeDtypeStruct((B, Cp), x.dtype)
    compiler_params = pltpu.CompilerParams(
        dimension_semantics=("parallel", "arbitrary"),
        vmem_limit_bytes=vmem_limit,
    )

    def make_call(resident_pipeline_mode):
        res_kw = ({} if resident_pipeline_mode is None
                  else {"pipeline_mode": resident_pipeline_mode})
        grid_spec = pltpu.PrefetchScalarGridSpec(
            num_scalar_prefetch=0,
            grid=grid,
            in_specs=[
                pl.BlockSpec((tb, ts, D), lambda i, s: (i, s, 0)),      # x tile
                pl.BlockSpec((D, Cp), lambda i, s: (0, 0), **res_kw),   # weight
                pl.BlockSpec((1, Cp), lambda i, s: (0, 0), **res_kw),   # bias
            ],
            out_specs=pl.BlockSpec((tb, Cp), lambda i, s: (i, 0)),
            scratch_shapes=[pltpu.VMEM((tb, D), jnp.float32)],
        )
        return pl.pallas_call(kernel, out_shape=out_shape,
                              grid_spec=grid_spec,
                              compiler_params=compiler_params)

    try:
        # Single-buffer the resident weight / bias (constant index_map): no
        # dead second copy in VMEM.
        out_padded = make_call(pl.Buffered(1))(x, w_pad, b_pad)
    except Exception:
        # TODO(synk): pipeline_mode / Buffered(1) rejected by this jax build;
        # fall back to default double-buffered resident blocks.
        out_padded = make_call(None)(x, w_pad, b_pad)

    return out_padded[:, :C]


def reference(x, weight, bias):
    x_mean = jnp.mean(x.astype(jnp.float32), axis=1)
    logits = x_mean @ weight.astype(jnp.float32).T + bias.astype(jnp.float32)
    return jax.nn.softmax(logits, axis=1).astype(x.dtype)


if __name__ == "__main__":
    B, S, D, C = 2, 32, 32, 10  # batch, seq, dim_in, num_classes

    key = jax.random.PRNGKey(0)
    kx, kw, kb = jax.random.split(key, 3)

    x = jax.random.normal(kx, (B, S, D), dtype=jnp.float32)
    bound = 1.0 / math.sqrt(D)
    weight = jax.random.uniform(kw, (C, D), dtype=jnp.float32,
                                minval=-bound, maxval=bound)
    bias = jax.random.uniform(kb, (C,), dtype=jnp.float32,
                              minval=-bound, maxval=bound)

    # f32 path; seq_tile=8 forces a 4-step sequence reduction so the
    # accumulator init/finalize path is exercised at these toy shapes.
    out = transformer_basic_head(x, weight, bias, seq_tile=8)
    out = jax.block_until_ready(out)
    ref = reference(x, weight, bias)
    assert out.shape == (B, C)
    assert jnp.allclose(out, ref, atol=1e-5, rtol=1e-5), "f32 mismatch vs reference"

    # bf16 streaming path (largest single win per review: halves HBM traffic);
    # uses a 16-row packed seq tile.
    xb = x.astype(jnp.bfloat16)
    wb = weight.astype(jnp.bfloat16)
    bb = bias.astype(jnp.bfloat16)
    out_b = transformer_basic_head(xb, wb, bb, seq_tile=16)
    out_b = jax.block_until_ready(out_b)
    ref_b = reference(xb, wb, bb)
    assert out_b.shape == (B, C)
    assert jnp.allclose(out_b.astype(jnp.float32), ref_b.astype(jnp.float32),
                        atol=2e-2, rtol=2e-2), "bf16 mismatch vs reference"

    print("KERNEL_OK")
</pallas_src>

<mosaic_0001>
module attributes {stable_mosaic.version = 11 : i64} {
  func.func @head_kernel(%arg0: i32, %arg1: i32, %arg2: memref<2x8x32xf32, #tpu.memory_space<vmem>>, %arg3: memref<32x128xf32, #tpu.memory_space<vmem>>, %arg4: memref<1x128xf32, #tpu.memory_space<vmem>>, %arg5: memref<2x128xf32, #tpu.memory_space<vmem>>, %arg6: memref<2x32xf32, #tpu.memory_space<vmem>>) attributes {dimension_semantics = [#tpu.dimension_semantics<parallel>, #tpu.dimension_semantics<arbitrary>], iteration_bounds = array<i64: 1, 4>, scalar_prefetch = 0 : i64, scratch_operands = 1 : i64, tpu.core_type = #tpu.core_type<tc>, window_params = [{transform_indices = @transform_0, window_bounds = array<i64: 2, 8, 32>}, {pipeline_mode = #tpu.pipeline_mode<synchronous>, transform_indices = @transform_1, window_bounds = array<i64: 32, 128>}, {pipeline_mode = #tpu.pipeline_mode<synchronous>, transform_indices = @transform_2, window_bounds = array<i64: 1, 128>}, {transform_indices = @transform_3, window_bounds = array<i64: 2, 128>}]} {
    %c0_i32 = arith.constant 0 : i32
    %0 = arith.cmpi eq, %arg1, %c0_i32 : i32
    %1 = arith.extui %0 : i1 to i32
    %c0_i32_0 = arith.constant 0 : i32
    %2 = arith.cmpi ne, %1, %c0_i32_0 : i32
    scf.if %2 {
      %cst_8 = arith.constant 0.000000e+00 : f32
      %11 = vector.broadcast %cst_8 : f32 to vector<2x32xf32>
      %c0_9 = arith.constant 0 : index
      %c0_10 = arith.constant 0 : index
      %12 = vector.load %arg6[%c0_9, %c0_10] : memref<2x32xf32, #tpu.memory_space<vmem>>, vector<2x32xf32>
      tpu.vector_store %arg6[%c0_9, %c0_10], %11 {strides = array<i32>} : memref<2x32xf32, #tpu.memory_space<vmem>>, vector<2x32xf32>,
    } else {
    }
    %c0 = arith.constant 0 : index
    %c0_1 = arith.constant 0 : index
    %3 = vector.load %arg6[%c0, %c0_1] : memref<2x32xf32, #tpu.memory_space<vmem>>, vector<2x32xf32>
    %c0_2 = arith.constant 0 : index
    %c0_3 = arith.constant 0 : index
    %c0_4 = arith.constant 0 : index
    %4 = vector.load %arg2[%c0_2, %c0_3, %c0_4] : memref<2x8x32xf32, #tpu.memory_space<vmem>>, vector<2x8x32xf32>
    %cst = arith.constant dense<0.000000e+00> : vector<2x32xf32>
    %5 = vector.multi_reduction <add>, %4, %cst [1] : vector<2x8x32xf32> to vector<2x32xf32>
    %6 = arith.addf %3, %5 : vector<2x32xf32>
    %c0_5 = arith.constant 0 : index
    %c0_6 = arith.constant 0 : index
    %7 = vector.load %arg6[%c0_5, %c0_6] : memref<2x32xf32, #tpu.memory_space<vmem>>, vector<2x32xf32>
    tpu.vector_store %arg6[%c0_5, %c0_6], %6 {strides = array<i32>} : memref<2x32xf32, #tpu.memory_space<vmem>>, vector<2x32xf32>,
    %c3_i32 = arith.constant 3 : i32
    %8 = arith.cmpi eq, %arg1, %c3_i32 : i32
    %9 = arith.extui %8 : i1 to i32
    %c0_i32_7 = arith.constant 0 : i32
    %10 = arith.cmpi ne, %9, %c0_i32_7 : i32
    scf.if %10 {
      %c0_8 = arith.constant 0 : index
      %c0_9 = arith.constant 0 : index
      %11 = vector.load %arg6[%c0_8, %c0_9] : memref<2x32xf32, #tpu.memory_space<vmem>>, vector<2x32xf32>
      %c0_10 = arith.constant 0 : index
      %c0_11 = arith.constant 0 : index
      %12 = vector.load %arg3[%c0_10, %c0_11] : memref<32x128xf32, #tpu.memory_space<vmem>>, vector<32x128xf32>
      %cst_12 = arith.constant dense<0.000000e+00> : vector<2x128xf32>
      %13 = tpu.matmul %11, %12, %cst_12 {dimension_numbers = #tpu.dot_dimension_numbers<[1], [0], [0], [1], [0, 0, 1, 1], [], []>} : vector<2x32xf32>, vector<32x128xf32>, vector<2x128xf32> -> vector<2x128xf32>
      %cst_13 = arith.constant 3.125000e-02 : f32
      %14 = vector.broadcast %cst_13 : f32 to vector<2x128xf32>
      %15 = arith.mulf %13, %14 : vector<2x128xf32>
      %c0_14 = arith.constant 0 : index
      %c0_15 = arith.constant 0 : index
      %16 = vector.load %arg4[%c0_14, %c0_15] : memref<1x128xf32, #tpu.memory_space<vmem>>, vector<1x128xf32>
      %17 = vector.broadcast %16 : vector<1x128xf32> to vector<2x128xf32>
      %18 = arith.addf %15, %17 : vector<2x128xf32>
      %cst_16 = arith.constant dense<0xFF800000> : vector<2xf32>
      %19 = vector.multi_reduction <maximumf>, %18, %cst_16 [1] : vector<2x128xf32> to vector<2xf32>
      %20 = vector.shape_cast %19 : vector<2xf32> to vector<2x1xf32>
      %21 = vector.broadcast %20 : vector<2x1xf32> to vector<2x128xf32>
      %22 = arith.subf %18, %21 : vector<2x128xf32>
      %23 = math.exp %22 : vector<2x128xf32>
      %cst_17 = arith.constant dense<0.000000e+00> : vector<2xf32>
      %24 = vector.multi_reduction <add>, %23, %cst_17 [1] : vector<2x128xf32> to vector<2xf32>
      %25 = vector.shape_cast %24 : vector<2xf32> to vector<2x1xf32>
      %26 = vector.broadcast %25 : vector<2x1xf32> to vector<2x128xf32>
      %27 = arith.divf %23, %26 : vector<2x128xf32>
      %c0_18 = arith.constant 0 : index
      %c0_19 = arith.constant 0 : index
      %28 = vector.load %arg5[%c0_18, %c0_19] : memref<2x128xf32, #tpu.memory_space<vmem>>, vector<2x128xf32>
      tpu.vector_store %arg5[%c0_18, %c0_19], %27 {strides = array<i32>} : memref<2x128xf32, #tpu.memory_space<vmem>>, vector<2x128xf32>,
    } else {
    }
    return
  }
  func.func @transform_0(%arg0: i32, %arg1: i32) -> (i32, i32, i32) {
    %c0_i32 = arith.constant 0 : i32
    %c0_i32_0 = arith.constant 0 : i32
    return %arg0, %arg1, %c0_i32 : i32, i32, i32
  }
  func.func @transform_1(%arg0: i32, %arg1: i32) -> (i32, i32) {
    %c0_i32 = arith.constant 0 : i32
    %c0_i32_0 = arith.constant 0 : i32
    %c0_i32_1 = arith.constant 0 : i32
    return %c0_i32, %c0_i32_0 : i32, i32
  }
  func.func @transform_2(%arg0: i32, %arg1: i32) -> (i32, i32) {
    %c0_i32 = arith.constant 0 : i32
    %c0_i32_0 = arith.constant 0 : i32
    %c0_i32_1 = arith.constant 0 : i32
    return %c0_i32, %c0_i32_0 : i32, i32
  }
  func.func @transform_3(%arg0: i32, %arg1: i32) -> (i32, i32) {
    %c0_i32 = arith.constant 0 : i32
    %c0_i32_0 = arith.constant 0 : i32
    return %arg0, %c0_i32 : i32, i32
  }
}

module attributes {stable_mosaic.version = 11 : i64} {
  func.func @head_kernel(%arg0: i32, %arg1: i32, %arg2: memref<2x8x32xf32, #tpu.memory_space<vmem>>, %arg3: memref<32x128xf32, #tpu.memory_space<vmem>>, %arg4: memref<1x128xf32, #tpu.memory_space<vmem>>, %arg5: memref<2x128xf32, #tpu.memory_space<vmem>>, %arg6: memref<2x32xf32, #tpu.memory_space<vmem>>) attributes {dimension_semantics = [#tpu.dimension_semantics<parallel>, #tpu.dimension_semantics<arbitrary>], iteration_bounds = array<i64: 1, 4>, scalar_prefetch = 0 : i64, scratch_operands = 1 : i64, tpu.core_type = #tpu.core_type<tc>, window_params = [{transform_indices = @transform_0, window_bounds = array<i64: 2, 8, 32>}, {pipeline_mode = #tpu.pipeline_mode<synchronous>, transform_indices = @transform_1, window_bounds = array<i64: 32, 128>}, {pipeline_mode = #tpu.pipeline_mode<synchronous>, transform_indices = @transform_2, window_bounds = array<i64: 1, 128>}, {transform_indices = @transform_3, window_bounds = array<i64: 2, 128>}]} {
    %c0_i32 = arith.constant 0 : i32
    %0 = arith.cmpi eq, %arg1, %c0_i32 : i32
    %1 = arith.extui %0 : i1 to i32
    %c0_i32_0 = arith.constant 0 : i32
    %2 = arith.cmpi ne, %1, %c0_i32_0 : i32
    scf.if %2 {
      %cst_8 = arith.constant 0.000000e+00 : f32
      %11 = vector.broadcast %cst_8 : f32 to vector<2x32xf32>
      %c0_9 = arith.constant 0 : index
      %c0_10 = arith.constant 0 : index
      %12 = vector.load %arg6[%c0_9, %c0_10] : memref<2x32xf32, #tpu.memory_space<vmem>>, vector<2x32xf32>
      tpu.vector_store %arg6[%c0_9, %c0_10], %11 {strides = array<i32>} : memref<2x32xf32, #tpu.memory_space<vmem>>, vector<2x32xf32>,
    } else {
    }
    %c0 = arith.constant 0 : index
    %c0_1 = arith.constant 0 : index
    %3 = vector.load %arg6[%c0, %c0_1] : memref<2x32xf32, #tpu.memory_space<vmem>>, vector<2x32xf32>
    %c0_2 = arith.constant 0 : index
    %c0_3 = arith.constant 0 : index
    %c0_4 = arith.constant 0 : index
    %4 = vector.load %arg2[%c0_2, %c0_3, %c0_4] : memref<2x8x32xf32, #tpu.memory_space<vmem>>, vector<2x8x32xf32>
    %cst = arith.constant dense<0.000000e+00> : vector<2x32xf32>
    %5 = vector.multi_reduction <add>, %4, %cst [1] : vector<2x8x32xf32> to vector<2x32xf32>
    %6 = arith.addf %3, %5 : vector<2x32xf32>
    %c0_5 = arith.constant 0 : index
    %c0_6 = arith.constant 0 : index
    %7 = vector.load %arg6[%c0_5, %c0_6] : memref<2x32xf32, #tpu.memory_space<vmem>>, vector<2x32xf32>
    tpu.vector_store %arg6[%c0_5, %c0_6], %6 {strides = array<i32>} : memref<2x32xf32, #tpu.memory_space<vmem>>, vector<2x32xf32>,
    %c3_i32 = arith.constant 3 : i32
    %8 = arith.cmpi eq, %arg1, %c3_i32 : i32
    %9 = arith.extui %8 : i1 to i32
    %c0_i32_7 = arith.constant 0 : i32
    %10 = arith.cmpi ne, %9, %c0_i32_7 : i32
    scf.if %10 {
      %c0_8 = arith.constant 0 : index
      %c0_9 = arith.constant 0 : index
      %11 = vector.load %arg6[%c0_8, %c0_9] : memref<2x32xf32, #tpu.memory_space<vmem>>, vector<2x32xf32>
      %c0_10 = arith.constant 0 : index
      %c0_11 = arith.constant 0 : index
      %12 = vector.load %arg3[%c0_10, %c0_11] : memref<32x128xf32, #tpu.memory_space<vmem>>, vector<32x128xf32>
      %cst_12 = arith.constant dense<0.000000e+00> : vector<2x128xf32>
      %13 = tpu.matmul %11, %12, %cst_12 {dimension_numbers = #tpu.dot_dimension_numbers<[1], [0], [0], [1], [0, 0, 1, 1], [], []>} : vector<2x32xf32>, vector<32x128xf32>, vector<2x128xf32> -> vector<2x128xf32>
      %cst_13 = arith.constant 3.125000e-02 : f32
      %14 = vector.broadcast %cst_13 : f32 to vector<2x128xf32>
      %15 = arith.mulf %13, %14 : vector<2x128xf32>
      %c0_14 = arith.constant 0 : index
      %c0_15 = arith.constant 0 : index
      %16 = vector.load %arg4[%c0_14, %c0_15] : memref<1x128xf32, #tpu.memory_space<vmem>>, vector<1x128xf32>
      %17 = vector.broadcast %16 : vector<1x128xf32> to vector<2x128xf32>
      %18 = arith.addf %15, %17 : vector<2x128xf32>
      %cst_16 = arith.constant dense<0xFF800000> : vector<2xf32>
      %19 = vector.multi_reduction <maximumf>, %18, %cst_16 [1] : vector<2x128xf32> to vector<2xf32>
      %20 = vector.shape_cast %19 : vector<2xf32> to vector<2x1xf32>
      %21 = vector.broadcast %20 : vector<2x1xf32> to vector<2x128xf32>
      %22 = arith.subf %18, %21 : vector<2x128xf32>
      %23 = math.exp %22 : vector<2x128xf32>
      %cst_17 = arith.constant dense<0.000000e+00> : vector<2xf32>
      %24 = vector.multi_reduction <add>, %23, %cst_17 [1] : vector<2x128xf32> to vector<2xf32>
      %25 = vector.shape_cast %24 : vector<2xf32> to vector<2x1xf32>
      %26 = vector.broadcast %25 : vector<2x1xf32> to vector<2x128xf32>
      %27 = arith.divf %23, %26 : vector<2x128xf32>
      %c0_18 = arith.constant 0 : index
      %c0_19 = arith.constant 0 : index
      %28 = vector.load %arg5[%c0_18, %c0_19] : memref<2x128xf32, #tpu.memory_space<vmem>>, vector<2x128xf32>
      tpu.vector_store %arg5[%c0_18, %c0_19], %27 {strides = array<i32>} : memref<2x128xf32, #tpu.memory_space<vmem>>, vector<2x128xf32>,
    } else {
    }
    return
  }
  func.func @transform_0(%arg0: i32, %arg1: i32) -> (i32, i32, i32) {
    %c0_i32 = arith.constant 0 : i32
    %c0_i32_0 = arith.constant 0 : i32
    return %arg0, %arg1, %c0_i32 : i32, i32, i32
  }
  func.func @transform_1(%arg0: i32, %arg1: i32) -> (i32, i32) {
    %c0_i32 = arith.constant 0 : i32
    %c0_i32_0 = arith.constant 0 : i32
    %c0_i32_1 = arith.constant 0 : i32
    return %c0_i32, %c0_i32_0 : i32, i32
  }
  func.func @transform_2(%arg0: i32, %arg1: i32) -> (i32, i32) {
    %c0_i32 = arith.constant 0 : i32
    %c0_i32_0 = arith.constant 0 : i32
    %c0_i32_1 = arith.constant 0 : i32
    return %c0_i32, %c0_i32_0 : i32, i32
  }
  func.func @transform_3(%arg0: i32, %arg1: i32) -> (i32, i32) {
    %c0_i32 = arith.constant 0 : i32
    %c0_i32_0 = arith.constant 0 : i32
    return %arg0, %c0_i32 : i32, i32
  }
}

</mosaic_0001>

<llo_original>
// kernel: tpu_custom_call.1
$region0: #{tpu_custom_call.1}
  #allocation0 [shape = 'u32[]', space=smem, size = 0x4, offset = 0x4, fixed_abs, tag = 'smem constant byte address 0x4 - core index']
  #allocation1 [shape = 'u32[72,128]{1,0:T(1,128)}', space=vmem, size = 0x9000, scoped, tag = 'internal scratch']
  #allocation2 [shape = 'f32[2,32]{1,0:T(2,128)}', space=vmem, size = 0x400, scoped, tag = 'scratch operand']
  %s0 = inlined_call_operand.hbm [shape: f32[2,32,32], index: 0, kind: input, shape index: {}]
  %s1 = inlined_call_operand.hbm [shape: f32[32,128], index: 1, kind: input, shape index: {}]
  %s2 = inlined_call_operand.vmem [shape: f32[1,128], index: 2, kind: input, shape index: {}]
  %s3 = inlined_call_operand.hbm [shape: f32[2,128], index: 3, kind: output, shape index: {}]
  %s4 = sld [smem:[#allocation0]]
  $region61: #{tpu_custom_call.1} parent=0
    _
  %s6 = ssub.s32 1, %s4
  %s7 = scalar_select 0, %s6, %s4
  $region1: #{tpu_custom_call.1} parent=0
    #allocation3 [shape = 'u8[16384]{0}', space=vmem, size = 0x4000, scoped, tag = 'input window, operand 0']
    #allocation4 [shape = 's32[2]{0}', space=sflag, size = 0x8, scoped, tag = 'scoped memory for tpu_custom_call.1']
    #allocation5 [shape = 's32[2]{0}', space=sflag, size = 0x8, scoped, tag = 'scoped memory for tpu_custom_call.1']
    #allocation6 [shape = 'u8[16384]{0}', space=vmem, size = 0x4000, scoped, tag = 'input window, operand 1, single buffered']
    #allocation7 [shape = 's32[1]{0}', space=sflag, size = 0x4, scoped, tag = 'scoped memory for tpu_custom_call.1']
    #allocation8 [shape = 'u8[1024]{0}', space=vmem, size = 0x400, scoped, tag = 'output window, operand 0, single buffered']
    %8 = vsyncpa [#allocation4], 0
    %s9 = scalar_lea.sflag [#allocation4], 1
    %10 = vsyncpa %s9, 0
    %11 = vsyncpa [#allocation7], 0
    %12 = vsyncpa [#allocation5], 0
    loop: start=0, step=1, limit=6
    $region2: #{tpu_custom_call.1} parent=1 // loop_pre_header
      _
    $region3: #{tpu_custom_call.1} parent=1 // loop_header
      %s14 = sphi 0, %s18
      %p15 = scmp.ge.s32.totalorder %s14, 6
      %s21 = sphi 0, %s33
      %s22 = sphi 0, %s29
      %s23 = sphi 0, %s21
      %s24 = sphi 0, %s22
      %s25 = sphi 0, %s23
      %s26 = sphi 0, %s24
      %s38 = sphi 0, %s40
      %s41 = sphi 0, %s38
      %s42 = sphi 0, %s41
      %s58 = sphi 0, %s42
      %s62 = sphi 0, %s62
      %s64 = sphi 0, %s62
      %s65 = sphi 0, %s64
      %s79 = sphi 0, %s65
      %s83 = sphi 0, %s83
      %s85 = sphi 0, %s83
      %s86 = sphi 0, %s85
      %s100 = sphi 0, %s86
      %s106 = sphi 0, %s108
      %s109 = sphi 0, %s106
      %s110 = sphi 0, %s109
      %s126 = sphi 0, %s110
    $region4: #{tpu_custom_call.1} parent=1 // loop_header_branch
      %17 = sbr.rel (%p15) target = $region8
    $region5: #{tpu_custom_call.1} parent=1 // loop_body
      %s19 = ssub.s32 %s14, 1
      %s20 = ssub.s32 %s14, 2
      %s27 = sadd.s32 1, %s22
      %p28 = scmp.ge.s32.totalorder %s27, 4
      %s29 = scalar_select %p28, 0, %s27
      %s30 = sadd.s32 1, %s21
      %s31 = scalar_select %p28, %s30, %s21
      %p32 = scmp.ge.s32.totalorder %s31, 1
      %s33 = scalar_select %p32, 0, %s31
      %s34 = ssub.s32 %s21, %s33
      %s35 = ssub.s32 %s22, %s29
      %s36 = sor.u32 %s34, %s35
      %p37 = scmp.eq.s32.totalorder %s36, 0
      %s39 = sadd.s32 %s38, 1
      %s40 = scalar_select %p37, %s38, %s39
      %p43 = pneg %p37
      %p44 = scmp.eq.s32.totalorder %s14, 3
      %p45 = por %p43, %p44
      %p46 = scmp.ne.s32.totalorder %s38, %s41
      %p47 = scmp.eq.s32.totalorder %s14, 0
      %p48 = por %p46, %p47
      %p49 = scmp.ne.s32.totalorder %s38, %s41
      %p50 = scmp.eq.s32.totalorder %s19, 3
      %p51 = por %p49, %p50
      %p52 = scmp.ne.s32.totalorder %s41, %s42
      %p53 = scmp.eq.s32.totalorder %s19, 0
      %p54 = por %p52, %p53
      %p55 = scmp.ne.s32.totalorder %s41, %s42
      %p56 = scmp.eq.s32.totalorder %s20, 3
      %p57 = por %p55, %p56
      %p59 = scmp.ne.s32.totalorder %s42, %s58
      %p60 = scmp.eq.s32.totalorder %s20, 0
      %p61 = por %p59, %p60
      %s63 = sadd.s32 %s62, 1
      %p66 = scmp.eq.s32.totalorder %s14, 3
      %p67 = scmp.ne.s32.totalorder %s62, %s64
      %p68 = scmp.eq.s32.totalorder %s14, 0
      %p69 = por %p67, %p68
      %p70 = scmp.ne.s32.totalorder %s62, %s64
      %p71 = scmp.eq.s32.totalorder %s19, 3
      %p72 = por %p70, %p71
      %p73 = scmp.ne.s32.totalorder %s64, %s65
      %p74 = scmp.eq.s32.totalorder %s19, 0
      %p75 = por %p73, %p74
      %p76 = scmp.ne.s32.totalorder %s64, %s65
      %p77 = scmp.eq.s32.totalorder %s20, 3
      %p78 = por %p76, %p77
      %p80 = scmp.ne.s32.totalorder %s65, %s79
      %p81 = scmp.eq.s32.totalorder %s20, 0
      %p82 = por %p80, %p81
      %s84 = sadd.s32 %s83, 1
      %p87 = scmp.eq.s32.totalorder %s14, 3
      %p88 = scmp.ne.s32.totalorder %s83, %s85
      %p89 = scmp.eq.s32.totalorder %s14, 0
      %p90 = por %p88, %p89
      %p91 = scmp.ne.s32.totalorder %s83, %s85
      %p92 = scmp.eq.s32.totalorder %s19, 3
      %p93 = por %p91, %p92
      %p94 = scmp.ne.s32.totalorder %s85, %s86
      %p95 = scmp.eq.s32.totalorder %s19, 0
      %p96 = por %p94, %p95
      %p97 = scmp.ne.s32.totalorder %s85, %s86
      %p98 = scmp.eq.s32.totalorder %s20, 3
      %p99 = por %p97, %p98
      %p101 = scmp.ne.s32.totalorder %s86, %s100
      %p102 = scmp.eq.s32.totalorder %s20, 0
      %p103 = por %p101, %p102
      %s104 = ssub.s32 %s21, %s33
      %p105 = scmp.eq.s32.totalorder %s104, 0
      %s107 = sadd.s32 %s106, 1
      %s108 = scalar_select %p105, %s106, %s107
      %p111 = pneg %p105
      %p112 = scmp.eq.s32.totalorder %s14, 3
      %p113 = por %p111, %p112
      %p114 = scmp.ne.s32.totalorder %s106, %s109
      %p115 = scmp.eq.s32.totalorder %s14, 0
      %p116 = por %p114, %p115
      %p117 = scmp.ne.s32.totalorder %s106, %s109
      %p118 = scmp.eq.s32.totalorder %s19, 3
      %p119 = por %p117, %p118
      %p120 = scmp.ne.s32.totalorder %s109, %s110
      %p121 = scmp.eq.s32.totalorder %s19, 0
      %p122 = por %p120, %p121
      %p123 = scmp.ne.s32.totalorder %s109, %s110
      %p124 = scmp.eq.s32.totalorder %s20, 3
      %p125 = por %p123, %p124
      %p127 = scmp.ne.s32.totalorder %s110, %s126
      %p128 = scmp.eq.s32.totalorder %s20, 0
      %p129 = por %p127, %p128
      %p130 = scmp.le.s32.totalorder 1, %s14
      %p131 = scmp.lt.s32.totalorder %s14, 5
      %p132 = pnand %p130, %p131
      %p133 = pneg %p132
      // Predicated region
      $region9: #{tpu_custom_call.1} parent=5 // pred_check
        _
      $region10: #{tpu_custom_call.1} parent=5 // pred_check_branch
        %135 = sbr.rel (%p132) target = $region12
      $region11: #{tpu_custom_call.1} parent=5 // pred_region
        %s136 = ssub.s32 %s14, 1
        // Predicated region
        $region13: #{tpu_custom_call.1} parent=11 // pred_check
          %p137 = pneg %p75
        $region14: #{tpu_custom_call.1} parent=11 // pred_check_branch
          %139 = sbr.rel (%p137) target = $region16
        $region15: #{tpu_custom_call.1} parent=11 // pred_region
          %141 = vsyncadd [#allocation7], 0
          %s142 = sshll.u32 %s1, 4
          %s143 = int_to_ptr.hbm [resolvable:$true] %s142
          %s144 = sshll.u32 [#allocation6], 4
          %s145 = int_to_ptr.vmem [resolvable:$true] %s144
          %150 = dma.hbm_to_vmem [thread:$0]  %s143, 512, %s145, [#allocation7], 128, 128, 8
        $region16: #{tpu_custom_call.1} parent=11 // pred_fallthru
          _
        // Predicated region
        $region17: #{tpu_custom_call.1} parent=11 // pred_check
          %p151 = pneg %p96
        $region18: #{tpu_custom_call.1} parent=11 // pred_check_branch
          %153 = sbr.rel (%p151) target = $region20
        $region19: #{tpu_custom_call.1} parent=11 // pred_region
          _
        $region20: #{tpu_custom_call.1} parent=11 // pred_fallthru
          _
      $region12: #{tpu_custom_call.1} parent=5 // pred_fallthru
        _
      %p154 = scmp.lt.s32.totalorder %s14, 4
      // Predicated region
      $region21: #{tpu_custom_call.1} parent=5 // pred_check
        %p155 = pneg %p154
      $region22: #{tpu_custom_call.1} parent=5 // pred_check_branch
        %157 = sbr.rel (%p155) target = $region24
      $region23: #{tpu_custom_call.1} parent=5 // pred_region
        // Predicated region
        $region25: #{tpu_custom_call.1} parent=23 // pred_check
          %p158 = pneg %p48
        $region26: #{tpu_custom_call.1} parent=23 // pred_check_branch
          %160 = sbr.rel (%p158) target = $region28
        $region27: #{tpu_custom_call.1} parent=23 // pred_region
          %s161 = sand.u32 %s38, 1
          %s162 = scalar_lea.sflag [#allocation4], %s161
          %s163 = sand.u32 %s38, 1
          %s164 = smul.addr %s163, 16
          %s165 = scalar_lea.vmem [#allocation3], %s164
          %s166 = smul.u32 2, %s21
          %168 = vsyncadd %s162, 0
          %s169 = smul.addr %s166, 4
          %s170 = sadd.s32 %s22, %s169
          %s171 = smul.addr %s170, 8
          %s172 = scalar_lea.hbm %s0, %s171
          %s173 = sshll.u32 %s172, 4
          %s174 = int_to_ptr.hbm [resolvable:$true] %s173
          %s175 = sshll.u32 %s165, 4
          %s176 = int_to_ptr.vmem [resolvable:$true] %s175
          %181 = dma.hbm_to_vmem [thread:$0]  %s174, 256, %s176, %s162, 512, 128, 8
        $region28: #{tpu_custom_call.1} parent=23 // pred_fallthru
          _
      $region24: #{tpu_custom_call.1} parent=5 // pred_fallthru
        _
      %p182 = scmp.le.s32.totalorder 1, %s14
      %p183 = scmp.lt.s32.totalorder %s14, 5
      %p184 = pnand %p182, %p183
      %p185 = pneg %p184
      // Predicated region
      $region29: #{tpu_custom_call.1} parent=5 // pred_check
        _
      $region30: #{tpu_custom_call.1} parent=5 // pred_check_branch
        %187 = sbr.rel (%p184) target = $region32
      $region31: #{tpu_custom_call.1} parent=5 // pred_region
        %s188 = ssub.s32 %s14, 1
        %s189 = sand.u32 %s41, 1
        %s190 = scalar_lea.sflag [#allocation4], %s189
        %s191 = sand.u32 %s41, 1
        %s192 = smul.addr %s191, 16
        %s193 = scalar_lea.vmem [#allocation3], %s192
        // Predicated region
        $region33: #{tpu_custom_call.1} parent=31 // pred_check
          %p194 = pneg %p54
        $region34: #{tpu_custom_call.1} parent=31 // pred_check_branch
          %196 = sbr.rel (%p194) target = $region36
        $region35: #{tpu_custom_call.1} parent=31 // pred_region
          %198 = dma.done %s190, 256
        $region36: #{tpu_custom_call.1} parent=31 // pred_fallthru
          _
        // Predicated region
        $region37: #{tpu_custom_call.1} parent=31 // pred_check
          %p199 = pneg %p75
        $region38: #{tpu_custom_call.1} parent=31 // pred_check_branch
          %201 = sbr.rel (%p199) target = $region40
        $region39: #{tpu_custom_call.1} parent=31 // pred_region
          %203 = dma.done [#allocation7], 512
        $region40: #{tpu_custom_call.1} parent=31 // pred_fallthru
          _
        %s204 = sand.u32 %s41, 1
        %s205 = scalar_lea.sflag [#allocation4], %s204
        %s206 = sand.u32 %s41, 1
        %s207 = smul.addr %s206, 16
        %s208 = scalar_lea.vmem [#allocation3], %s207
        %p209 = pneg %p54
        %p210 = pneg %p51
        %p211 = pneg %p75
        %p212 = pneg %p72
        %p213 = pneg %p96
        %p214 = pneg %p93
        %p215 = pneg %p122
        %p216 = pneg %p119
        %s217 = smul.u32 2, %s23
        %p218 = scmp.eq.s32.totalorder %s24, 0
        // Predicated region
        $region41: #{tpu_custom_call.1} parent=31 // pred_check
          %p219 = pneg %p218
        $region42: #{tpu_custom_call.1} parent=31 // pred_check_branch
          %221 = sbr.rel (%p219) target = $region44
        $region43: #{tpu_custom_call.1} parent=31 // pred_region
          %vm222 = vcmask 254976
          %223 = vst.msk [vmem:[#allocation2] sm:$0x3] %vm222, 0.0
        $region44: #{tpu_custom_call.1} parent=31 // pred_fallthru
          _
        %v224 = vld [vmem:[#allocation2] sm:$0x3]
        %v225 = vld [vmem:[%s193] sm:$0xff]
        %v226 = vld [vmem:[%s193 + $0x8] sm:$0xff]
        %vm227 = vcmask 261120
        %v228 = vsel %vm227, %v225, 0.0
        %v229 = vrot.slane %v228, 4
        %v230 = vadd.f32 %v228, %v229
        %v231 = vrot.slane %v230, 2
        %v232 = vadd.f32 %v230, %v231
        %v233 = vrot.slane %v232, 1
        %v234 = vadd.f32 %v232, %v233
        %v235 = vsel %vm227, %v226, 0.0
        %v236 = vrot.slane %v235, 4
        %v237 = vadd.f32 %v235, %v236
        %v238 = vrot.slane %v237, 2
        %v239 = vadd.f32 %v237, %v238
        %v240 = vrot.slane %v239, 1
        %v241 = vadd.f32 %v239, %v240
        %vm244 = vcmask 1041409
        %v245 = vsel %vm244, %v241, %v234
        %v247 = vadd.f32 %v224, %v245
        %vm248 = vcmask 254976
        %249 = vst.msk [vmem:[#allocation2] sm:$0x3] %vm248, %v247
        %p250 = scmp.eq.s32.totalorder %s24, 3
        // Predicated region
        $region45: #{tpu_custom_call.1} parent=31 // pred_check
          %p251 = pneg %p250
        $region46: #{tpu_custom_call.1} parent=31 // pred_check_branch
          %253 = sbr.rel (%p251) target = $region48
        $region47: #{tpu_custom_call.1} parent=31 // pred_region
          %v254 = vld [vmem:[#allocation2] sm:$0x3]
          %v255 = vld [vmem:[#allocation6] sm:$0xff]
          %v256 = vld [vmem:[#allocation6 + $0x8] sm:$0xff]
          %v257 = vld [vmem:[#allocation6 + $0x10] sm:$0xff]
          %v258 = vld [vmem:[#allocation6 + $0x18] sm:$0xff]
          %v260 = vsel %vm227, %v254, 0
          %262 = vmatpush.msra.mxu0 0.0
          %263 = vmatpush.msra.mxu0 0.0
          %264 = vmatpush.msra.mxu0 0.0
          %265 = vmatpush.msra.mxu0 0.0
          %266 = vmatpush.msra.mxu0 0.0
          %267 = vmatpush.msra.mxu0 0.0
          %268 = vmatpush.msra.mxu0 0.0
          %269 = vmatpush.msra.mxu0 0.0
          %270 = vmatpush.msra.mxu0 0.0
          %271 = vmatpush.msra.mxu0 0.0
          %272 = vmatpush.msra.mxu0 0.0
          %273 = vmatpush.msra.mxu0 0.0
          %274 = vmatpush.msra.mxu0 %v258
          %275 = vmatpush.msra.mxu0 %v257
          %276 = vmatpush.msra.mxu0 %v256
          %277 = vmatpush.msra.mxu0 %v255
          %278 = vmatmul.f32.gmra.mxu0 %v260
          %v279 = vpop.f32.mrf.mxu0
          %v280 = vadd.f32 0.0, %v279
          %281 = vdwg.mxu0
          %v282 = vmul.f32 %v280, 0.03125
          %v283 = vld [vmem:[%s2] sm:$0x1]
          %v285 = vperm.slane %v283, 0
          %v287 = vadd.f32 %v282, %v285
          %vm288 = vcmask 1041408
          %v289 = vsel %vm288, %v287, -inf
          %290 = vmax.xlane.f32.xlu0 %v289
          %v291 = vpop.xlane.xlu0 %290
          %v292 = vsub.f32 %v287, %v291
          %v293 = vmul.f32 %v292, 1.442695
          %v294 = vpow.pop %v293
          %v295 = vsel %vm288, %v294, 0.0
          %296 = vadd.xlane.f32.xlu0 %v295
          %v297 = vpop.xlane.xlu0 %296
          %v298 = vrcp.pop %v297
          %v299 = vmul.f32 %v297, %v298
          %v300 = vsub.f32 1.0, %v299
          %v301 = vmul.f32 %v298, %v300
          %v302 = vadd.f32 %v298, %v301
          %vm303 = vweird.f32 %v297
          %vm304 = vweird.f32 %v298
          %vm305 = vmor %vm303, %vm304
          %v306 = vsel %vm305, %v298, %v302
          %v307 = vand.u32 2147483647, %v297
          %vm308 = vcmp.eq.f32.partialorder %v307, 8.507059e+37
          %v309 = vand.u32 %v297, 2147483648
          %v310 = vor.u32 1.1754944e-38, %v309
          %v311 = vsel %vm308, %v310, %v306
          %v312 = vmul.f32 %v294, %v311
          %313 = vst [vmem:[#allocation8] sm:$0x3] %v312
        $region48: #{tpu_custom_call.1} parent=31 // pred_fallthru
          _
        // Predicated region
        $region49: #{tpu_custom_call.1} parent=31 // pred_check
          %p314 = pneg %p119
        $region50: #{tpu_custom_call.1} parent=31 // pred_check_branch
          %316 = sbr.rel (%p314) target = $region52
        $region51: #{tpu_custom_call.1} parent=31 // pred_region
          %318 = vsyncadd [#allocation5], 0
          %s319 = smul.addr %s23, 2
          %s320 = scalar_lea.hbm %s3, %s319
          %s322 = sshll.u32 [#allocation8], 4
          %s323 = int_to_ptr.vmem [resolvable:$true] %s322
          %s324 = sshll.u32 %s320, 4
          %s325 = int_to_ptr.hbm [resolvable:$true] %s324
          %327 = dma.vmem_to_hbm [thread:$0]  %s323, 32, %s325, [#allocation5]
        $region52: #{tpu_custom_call.1} parent=31 // pred_fallthru
          _
        // Predicated region
        $region53: #{tpu_custom_call.1} parent=31 // pred_check
          %p328 = pneg %p119
        $region54: #{tpu_custom_call.1} parent=31 // pred_check_branch
          %330 = sbr.rel (%p328) target = $region56
        $region55: #{tpu_custom_call.1} parent=31 // pred_region
          %332 = dma.done [#allocation5], 32
        $region56: #{tpu_custom_call.1} parent=31 // pred_fallthru
          _
      $region32: #{tpu_custom_call.1} parent=5 // pred_fallthru
        _
      %p333 = scmp.le.s32.totalorder 2, %s14
      // Predicated region
      $region57: #{tpu_custom_call.1} parent=5 // pred_check
        %p334 = pneg %p333
      $region58: #{tpu_custom_call.1} parent=5 // pred_check_branch
        %336 = sbr.rel (%p334) target = $region60
      $region59: #{tpu_custom_call.1} parent=5 // pred_region
        %s337 = ssub.s32 %s14, 2
      $region60: #{tpu_custom_call.1} parent=5 // pred_fallthru
        _
    $region6: #{tpu_custom_call.1} parent=1 // loop_footer
      %s18 = sadd.s32 1, %s14
    $region7: #{tpu_custom_call.1} parent=1 // loop_footer_branch
      %13 = sbr.rel target = $region3
    $region8: #{tpu_custom_call.1} parent=1 // loop_exit
      _
    %338 = vsyncpa [#allocation4], 1
    %s339 = scalar_lea.sflag [#allocation4], 1
    %340 = vsyncpa %s339, 1
    %341 = vsyncpa [#allocation7], 1
    %342 = vsyncpa [#allocation5], 1
    %s343 = scalar_lea.sflag [#allocation5], 1
    %344 = vsyncpa %s343, 1

// kernel: tpu_custom_call.1
$region0: #{tpu_custom_call.1}
  #allocation0 [shape = 'u32[]', space=smem, size = 0x4, offset = 0x4, fixed_abs, tag = 'smem constant byte address 0x4 - core index']
  #allocation1 [shape = 'u32[72,128]{1,0:T(1,128)}', space=vmem, size = 0x9000, scoped, tag = 'internal scratch']
  #allocation2 [shape = 'f32[2,32]{1,0:T(2,128)}', space=vmem, size = 0x400, scoped, tag = 'scratch operand']
  %s0 = inlined_call_operand.hbm [shape: f32[2,32,32], index: 0, kind: input, shape index: {}]
  %s1 = inlined_call_operand.hbm [shape: f32[32,128], index: 1, kind: input, shape index: {}]
  %s2 = inlined_call_operand.vmem [shape: f32[1,128], index: 2, kind: input, shape index: {}]
  %s3 = inlined_call_operand.hbm [shape: f32[2,128], index: 3, kind: output, shape index: {}]
  %s4 = sld [smem:[#allocation0]]
  $region61: #{tpu_custom_call.1} parent=0
    _
  %s6 = ssub.s32 1, %s4
  %s7 = scalar_select 0, %s6, %s4
  $region1: #{tpu_custom_call.1} parent=0
    #allocation3 [shape = 'u8[16384]{0}', space=vmem, size = 0x4000, scoped, tag = 'input window, operand 0']
    #allocation4 [shape = 's32[2]{0}', space=sflag, size = 0x8, scoped, tag = 'scoped memory for tpu_custom_call.1']
    #allocation5 [shape = 's32[2]{0}', space=sflag, size = 0x8, scoped, tag = 'scoped memory for tpu_custom_call.1']
    #allocation6 [shape = 'u8[16384]{0}', space=vmem, size = 0x4000, scoped, tag = 'input window, operand 1, single buffered']
    #allocation7 [shape = 's32[1]{0}', space=sflag, size = 0x4, scoped, tag = 'scoped memory for tpu_custom_call.1']
    #allocation8 [shape = 'u8[1024]{0}', space=vmem, size = 0x400, scoped, tag = 'output window, operand 0, single buffered']
    %8 = vsyncpa [#allocation4], 0
    %s9 = scalar_lea.sflag [#allocation4], 1
    %10 = vsyncpa %s9, 0
    %11 = vsyncpa [#allocation7], 0
    %12 = vsyncpa [#allocation5], 0
    loop: start=0, step=1, limit=6
    $region2: #{tpu_custom_call.1} parent=1 // loop_pre_header
      _
    $region3: #{tpu_custom_call.1} parent=1 // loop_header
      %s14 = sphi 0, %s18
      %p15 = scmp.ge.s32.totalorder %s14, 6
      %s21 = sphi 0, %s33
      %s22 = sphi 0, %s29
      %s23 = sphi 0, %s21
      %s24 = sphi 0, %s22
      %s25 = sphi 0, %s23
      %s26 = sphi 0, %s24
      %s38 = sphi 0, %s40
      %s41 = sphi 0, %s38
      %s42 = sphi 0, %s41
      %s58 = sphi 0, %s42
      %s62 = sphi 0, %s62
      %s64 = sphi 0, %s62
      %s65 = sphi 0, %s64
      %s79 = sphi 0, %s65
      %s83 = sphi 0, %s83
      %s85 = sphi 0, %s83
      %s86 = sphi 0, %s85
      %s100 = sphi 0, %s86
      %s106 = sphi 0, %s108
      %s109 = sphi 0, %s106
      %s110 = sphi 0, %s109
      %s126 = sphi 0, %s110
    $region4: #{tpu_custom_call.1} parent=1 // loop_header_branch
      %17 = sbr.rel (%p15) target = $region8
    $region5: #{tpu_custom_call.1} parent=1 // loop_body
      %s19 = ssub.s32 %s14, 1
      %s20 = ssub.s32 %s14, 2
      %s27 = sadd.s32 1, %s22
      %p28 = scmp.ge.s32.totalorder %s27, 4
      %s29 = scalar_select %p28, 0, %s27
      %s30 = sadd.s32 1, %s21
      %s31 = scalar_select %p28, %s30, %s21
      %p32 = scmp.ge.s32.totalorder %s31, 1
      %s33 = scalar_select %p32, 0, %s31
      %s34 = ssub.s32 %s21, %s33
      %s35 = ssub.s32 %s22, %s29
      %s36 = sor.u32 %s34, %s35
      %p37 = scmp.eq.s32.totalorder %s36, 0
      %s39 = sadd.s32 %s38, 1
      %s40 = scalar_select %p37, %s38, %s39
      %p43 = pneg %p37
      %p44 = scmp.eq.s32.totalorder %s14, 3
      %p45 = por %p43, %p44
      %p46 = scmp.ne.s32.totalorder %s38, %s41
      %p47 = scmp.eq.s32.totalorder %s14, 0
      %p48 = por %p46, %p47
      %p49 = scmp.ne.s32.totalorder %s38, %s41
      %p50 = scmp.eq.s32.totalorder %s19, 3
      %p51 = por %p49, %p50
      %p52 = scmp.ne.s32.totalorder %s41, %s42
      %p53 = scmp.eq.s32.totalorder %s19, 0
      %p54 = por %p52, %p53
      %p55 = scmp.ne.s32.totalorder %s41, %s42
      %p56 = scmp.eq.s32.totalorder %s20, 3
      %p57 = por %p55, %p56
      %p59 = scmp.ne.s32.totalorder %s42, %s58
      %p60 = scmp.eq.s32.totalorder %s20, 0
      %p61 = por %p59, %p60
      %s63 = sadd.s32 %s62, 1
      %p66 = scmp.eq.s32.totalorder %s14, 3
      %p67 = scmp.ne.s32.totalorder %s62, %s64
      %p68 = scmp.eq.s32.totalorder %s14, 0
      %p69 = por %p67, %p68
      %p70 = scmp.ne.s32.totalorder %s62, %s64
      %p71 = scmp.eq.s32.totalorder %s19, 3
      %p72 = por %p70, %p71
      %p73 = scmp.ne.s32.totalorder %s64, %s65
      %p74 = scmp.eq.s32.totalorder %s19, 0
      %p75 = por %p73, %p74
      %p76 = scmp.ne.s32.totalorder %s64, %s65
      %p77 = scmp.eq.s32.totalorder %s20, 3
      %p78 = por %p76, %p77
      %p80 = scmp.ne.s32.totalorder %s65, %s79
      %p81 = scmp.eq.s32.totalorder %s20, 0
      %p82 = por %p80, %p81
      %s84 = sadd.s32 %s83, 1
      %p87 = scmp.eq.s32.totalorder %s14, 3
      %p88 = scmp.ne.s32.totalorder %s83, %s85
      %p89 = scmp.eq.s32.totalorder %s14, 0
      %p90 = por %p88, %p89
      %p91 = scmp.ne.s32.totalorder %s83, %s85
      %p92 = scmp.eq.s32.totalorder %s19, 3
      %p93 = por %p91, %p92
      %p94 = scmp.ne.s32.totalorder %s85, %s86
      %p95 = scmp.eq.s32.totalorder %s19, 0
      %p96 = por %p94, %p95
      %p97 = scmp.ne.s32.totalorder %s85, %s86
      %p98 = scmp.eq.s32.totalorder %s20, 3
      %p99 = por %p97, %p98
      %p101 = scmp.ne.s32.totalorder %s86, %s100
      %p102 = scmp.eq.s32.totalorder %s20, 0
      %p103 = por %p101, %p102
      %s104 = ssub.s32 %s21, %s33
      %p105 = scmp.eq.s32.totalorder %s104, 0
      %s107 = sadd.s32 %s106, 1
      %s108 = scalar_select %p105, %s106, %s107
      %p111 = pneg %p105
      %p112 = scmp.eq.s32.totalorder %s14, 3
      %p113 = por %p111, %p112
      %p114 = scmp.ne.s32.totalorder %s106, %s109
      %p115 = scmp.eq.s32.totalorder %s14, 0
      %p116 = por %p114, %p115
      %p117 = scmp.ne.s32.totalorder %s106, %s109
      %p118 = scmp.eq.s32.totalorder %s19, 3
      %p119 = por %p117, %p118
      %p120 = scmp.ne.s32.totalorder %s109, %s110
      %p121 = scmp.eq.s32.totalorder %s19, 0
      %p122 = por %p120, %p121
      %p123 = scmp.ne.s32.totalorder %s109, %s110
      %p124 = scmp.eq.s32.totalorder %s20, 3
      %p125 = por %p123, %p124
      %p127 = scmp.ne.s32.totalorder %s110, %s126
      %p128 = scmp.eq.s32.totalorder %s20, 0
      %p129 = por %p127, %p128
      %p130 = scmp.le.s32.totalorder 1, %s14
      %p131 = scmp.lt.s32.totalorder %s14, 5
      %p132 = pnand %p130, %p131
      %p133 = pneg %p132
      // Predicated region
      $region9: #{tpu_custom_call.1} parent=5 // pred_check
        _
      $region10: #{tpu_custom_call.1} parent=5 // pred_check_branch
        %135 = sbr.rel (%p132) target = $region12
      $region11: #{tpu_custom_call.1} parent=5 // pred_region
        %s136 = ssub.s32 %s14, 1
        // Predicated region
        $region13: #{tpu_custom_call.1} parent=11 // pred_check
          %p137 = pneg %p75
        $region14: #{tpu_custom_call.1} parent=11 // pred_check_branch
          %139 = sbr.rel (%p137) target = $region16
        $region15: #{tpu_custom_call.1} parent=11 // pred_region
          %141 = vsyncadd [#allocation7], 0
          %s142 = sshll.u32 %s1, 4
          %s143 = int_to_ptr.hbm [resolvable:$true] %s142
          %s144 = sshll.u32 [#allocation6], 4
          %s145 = int_to_ptr.vmem [resolvable:$true] %s144
          %150 = dma.hbm_to_vmem [thread:$0]  %s143, 512, %s145, [#allocation7], 128, 128, 8
        $region16: #{tpu_custom_call.1} parent=11 // pred_fallthru
          _
        // Predicated region
        $region17: #{tpu_custom_call.1} parent=11 // pred_check
          %p151 = pneg %p96
        $region18: #{tpu_custom_call.1} parent=11 // pred_check_branch
          %153 = sbr.rel (%p151) target = $region20
        $region19: #{tpu_custom_call.1} parent=11 // pred_region
          _
        $region20: #{tpu_custom_call.1} parent=11 // pred_fallthru
          _
      $region12: #{tpu_custom_call.1} parent=5 // pred_fallthru
        _
      %p154 = scmp.lt.s32.totalorder %s14, 4
      // Predicated region
      $region21: #{tpu_custom_call.1} parent=5 // pred_check
        %p155 = pneg %p154
      $region22: #{tpu_custom_call.1} parent=5 // pred_check_branch
        %157 = sbr.rel (%p155) target = $region24
      $region23: #{tpu_custom_call.1} parent=5 // pred_region
        // Predicated region
        $region25: #{tpu_custom_call.1} parent=23 // pred_check
          %p158 = pneg %p48
        $region26: #{tpu_custom_call.1} parent=23 // pred_check_branch
          %160 = sbr.rel (%p158) target = $region28
        $region27: #{tpu_custom_call.1} parent=23 // pred_region
          %s161 = sand.u32 %s38, 1
          %s162 = scalar_lea.sflag [#allocation4], %s161
          %s163 = sand.u32 %s38, 1
          %s164 = smul.addr %s163, 16
          %s165 = scalar_lea.vmem [#allocation3], %s164
          %s166 = smul.u32 2, %s21
          %168 = vsyncadd %s162, 0
          %s169 = smul.addr %s166, 4
          %s170 = sadd.s32 %s22, %s169
          %s171 = smul.addr %s170, 8
          %s172 = scalar_lea.hbm %s0, %s171
          %s173 = sshll.u32 %s172, 4
          %s174 = int_to_ptr.hbm [resolvable:$true] %s173
          %s175 = sshll.u32 %s165, 4
          %s176 = int_to_ptr.vmem [resolvable:$true] %s175
          %181 = dma.hbm_to_vmem [thread:$0]  %s174, 256, %s176, %s162, 512, 128, 8
        $region28: #{tpu_custom_call.1} parent=23 // pred_fallthru
          _
      $region24: #{tpu_custom_call.1} parent=5 // pred_fallthru
        _
      %p182 = scmp.le.s32.totalorder 1, %s14
      %p183 = scmp.lt.s32.totalorder %s14, 5
      %p184 = pnand %p182, %p183
      %p185 = pneg %p184
      // Predicated region
      $region29: #{tpu_custom_call.1} parent=5 // pred_check
        _
      $region30: #{tpu_custom_call.1} parent=5 // pred_check_branch
        %187 = sbr.rel (%p184) target = $region32
      $region31: #{tpu_custom_call.1} parent=5 // pred_region
        %s188 = ssub.s32 %s14, 1
        %s189 = sand.u32 %s41, 1
        %s190 = scalar_lea.sflag [#allocation4], %s189
        %s191 = sand.u32 %s41, 1
        %s192 = smul.addr %s191, 16
        %s193 = scalar_lea.vmem [#allocation3], %s192
        // Predicated region
        $region33: #{tpu_custom_call.1} parent=31 // pred_check
          %p194 = pneg %p54
        $region34: #{tpu_custom_call.1} parent=31 // pred_check_branch
          %196 = sbr.rel (%p194) target = $region36
        $region35: #{tpu_custom_call.1} parent=31 // pred_region
          %198 = dma.done %s190, 256
        $region36: #{tpu_custom_call.1} parent=31 // pred_fallthru
          _
        // Predicated region
        $region37: #{tpu_custom_call.1} parent=31 // pred_check
          %p199 = pneg %p75
        $region38: #{tpu_custom_call.1} parent=31 // pred_check_branch
          %201 = sbr.rel (%p199) target = $region40
        $region39: #{tpu_custom_call.1} parent=31 // pred_region
          %203 = dma.done [#allocation7], 512
        $region40: #{tpu_custom_call.1} parent=31 // pred_fallthru
          _
        %s204 = sand.u32 %s41, 1
        %s205 = scalar_lea.sflag [#allocation4], %s204
        %s206 = sand.u32 %s41, 1
        %s207 = smul.addr %s206, 16
        %s208 = scalar_lea.vmem [#allocation3], %s207
        %p209 = pneg %p54
        %p210 = pneg %p51
        %p211 = pneg %p75
        %p212 = pneg %p72
        %p213 = pneg %p96
        %p214 = pneg %p93
        %p215 = pneg %p122
        %p216 = pneg %p119
        %s217 = smul.u32 2, %s23
        %p218 = scmp.eq.s32.totalorder %s24, 0
        // Predicated region
        $region41: #{tpu_custom_call.1} parent=31 // pred_check
          %p219 = pneg %p218
        $region42: #{tpu_custom_call.1} parent=31 // pred_check_branch
          %221 = sbr.rel (%p219) target = $region44
        $region43: #{tpu_custom_call.1} parent=31 // pred_region
          %vm222 = vcmask 254976
          %223 = vst.msk [vmem:[#allocation2] sm:$0x3] %vm222, 0.0
        $region44: #{tpu_custom_call.1} parent=31 // pred_fallthru
          _
        %v224 = vld [vmem:[#allocation2] sm:$0x3]
        %v225 = vld [vmem:[%s193] sm:$0xff]
        %v226 = vld [vmem:[%s193 + $0x8] sm:$0xff]
        %vm227 = vcmask 261120
        %v228 = vsel %vm227, %v225, 0.0
        %v229 = vrot.slane %v228, 4
        %v230 = vadd.f32 %v228, %v229
        %v231 = vrot.slane %v230, 2
        %v232 = vadd.f32 %v230, %v231
        %v233 = vrot.slane %v232, 1
        %v234 = vadd.f32 %v232, %v233
        %v235 = vsel %vm227, %v226, 0.0
        %v236 = vrot.slane %v235, 4
        %v237 = vadd.f32 %v235, %v236
        %v238 = vrot.slane %v237, 2
        %v239 = vadd.f32 %v237, %v238
        %v240 = vrot.slane %v239, 1
        %v241 = vadd.f32 %v239, %v240
        %vm244 = vcmask 1041409
        %v245 = vsel %vm244, %v241, %v234
        %v247 = vadd.f32 %v224, %v245
        %vm248 = vcmask 254976
        %249 = vst.msk [vmem:[#allocation2] sm:$0x3] %vm248, %v247
        %p250 = scmp.eq.s32.totalorder %s24, 3
        // Predicated region
        $region45: #{tpu_custom_call.1} parent=31 // pred_check
          %p251 = pneg %p250
        $region46: #{tpu_custom_call.1} parent=31 // pred_check_branch
          %253 = sbr.rel (%p251) target = $region48
        $region47: #{tpu_custom_call.1} parent=31 // pred_region
          %v254 = vld [vmem:[#allocation2] sm:$0x3]
          %v255 = vld [vmem:[#allocation6] sm:$0xff]
          %v256 = vld [vmem:[#allocation6 + $0x8] sm:$0xff]
          %v257 = vld [vmem:[#allocation6 + $0x10] sm:$0xff]
          %v258 = vld [vmem:[#allocation6 + $0x18] sm:$0xff]
          %v260 = vsel %vm227, %v254, 0
          %262 = vmatpush.msra.mxu0 0.0
          %263 = vmatpush.msra.mxu0 0.0
          %264 = vmatpush.msra.mxu0 0.0
          %265 = vmatpush.msra.mxu0 0.0
          %266 = vmatpush.msra.mxu0 0.0
          %267 = vmatpush.msra.mxu0 0.0
          %268 = vmatpush.msra.mxu0 0.0
          %269 = vmatpush.msra.mxu0 0.0
          %270 = vmatpush.msra.mxu0 0.0
          %271 = vmatpush.msra.mxu0 0.0
          %272 = vmatpush.msra.mxu0 0.0
          %273 = vmatpush.msra.mxu0 0.0
          %274 = vmatpush.msra.mxu0 %v258
          %275 = vmatpush.msra.mxu0 %v257
          %276 = vmatpush.msra.mxu0 %v256
          %277 = vmatpush.msra.mxu0 %v255
          %278 = vmatmul.f32.gmra.mxu0 %v260
          %v279 = vpop.f32.mrf.mxu0
          %v280 = vadd.f32 0.0, %v279
          %281 = vdwg.mxu0
          %v282 = vmul.f32 %v280, 0.03125
          %v283 = vld [vmem:[%s2] sm:$0x1]
          %v285 = vperm.slane %v283, 0
          %v287 = vadd.f32 %v282, %v285
          %vm288 = vcmask 1041408
          %v289 = vsel %vm288, %v287, -inf
          %290 = vmax.xlane.f32.xlu0 %v289
          %v291 = vpop.xlane.xlu0 %290
          %v292 = vsub.f32 %v287, %v291
          %v293 = vmul.f32 %v292, 1.442695
          %v294 = vpow.pop %v293
          %v295 = vsel %vm288, %v294, 0.0
          %296 = vadd.xlane.f32.xlu0 %v295
          %v297 = vpop.xlane.xlu0 %296
          %v298 = vrcp.pop %v297
          %v299 = vmul.f32 %v297, %v298
          %v300 = vsub.f32 1.0, %v299
          %v301 = vmul.f32 %v298, %v300
          %v302 = vadd.f32 %v298, %v301
          %vm303 = vweird.f32 %v297
          %vm304 = vweird.f32 %v298
          %vm305 = vmor %vm303, %vm304
          %v306 = vsel %vm305, %v298, %v302
          %v307 = vand.u32 2147483647, %v297
          %vm308 = vcmp.eq.f32.partialorder %v307, 8.507059e+37
          %v309 = vand.u32 %v297, 2147483648
          %v310 = vor.u32 1.1754944e-38, %v309
          %v311 = vsel %vm308, %v310, %v306
          %v312 = vmul.f32 %v294, %v311
          %313 = vst [vmem:[#allocation8] sm:$0x3] %v312
        $region48: #{tpu_custom_call.1} parent=31 // pred_fallthru
          _
        // Predicated region
        $region49: #{tpu_custom_call.1} parent=31 // pred_check
          %p314 = pneg %p119
        $region50: #{tpu_custom_call.1} parent=31 // pred_check_branch
          %316 = sbr.rel (%p314) target = $region52
        $region51: #{tpu_custom_call.1} parent=31 // pred_region
          %318 = vsyncadd [#allocation5], 0
          %s319 = smul.addr %s23, 2
          %s320 = scalar_lea.hbm %s3, %s319
          %s322 = sshll.u32 [#allocation8], 4
          %s323 = int_to_ptr.vmem [resolvable:$true] %s322
          %s324 = sshll.u32 %s320, 4
          %s325 = int_to_ptr.hbm [resolvable:$true] %s324
          %327 = dma.vmem_to_hbm [thread:$0]  %s323, 32, %s325, [#allocation5]
        $region52: #{tpu_custom_call.1} parent=31 // pred_fallthru
          _
        // Predicated region
        $region53: #{tpu_custom_call.1} parent=31 // pred_check
          %p328 = pneg %p119
        $region54: #{tpu_custom_call.1} parent=31 // pred_check_branch
          %330 = sbr.rel (%p328) target = $region56
        $region55: #{tpu_custom_call.1} parent=31 // pred_region
          %332 = dma.done [#allocation5], 32
        $region56: #{tpu_custom_call.1} parent=31 // pred_fallthru
          _
      $region32: #{tpu_custom_call.1} parent=5 // pred_fallthru
        _
      %p333 = scmp.le.s32.totalorder 2, %s14
      // Predicated region
      $region57: #{tpu_custom_call.1} parent=5 // pred_check
        %p334 = pneg %p333
      $region58: #{tpu_custom_call.1} parent=5 // pred_check_branch
        %336 = sbr.rel (%p334) target = $region60
      $region59: #{tpu_custom_call.1} parent=5 // pred_region
        %s337 = ssub.s32 %s14, 2
      $region60: #{tpu_custom_call.1} parent=5 // pred_fallthru
        _
    $region6: #{tpu_custom_call.1} parent=1 // loop_footer
      %s18 = sadd.s32 1, %s14
    $region7: #{tpu_custom_call.1} parent=1 // loop_footer_branch
      %13 = sbr.rel target = $region3
    $region8: #{tpu_custom_call.1} parent=1 // loop_exit
      _
    %338 = vsyncpa [#allocation4], 1
    %s339 = scalar_lea.sflag [#allocation4], 1
    %340 = vsyncpa %s339, 1
    %341 = vsyncpa [#allocation7], 1
    %342 = vsyncpa [#allocation5], 1
    %s343 = scalar_lea.sflag [#allocation5], 1
    %344 = vsyncpa %s343, 1

</llo_original>
